<compile_context>
chip_gen: v7x
topology: tpu7x:2x2x1
jax: 0.10.0
libtpu: 0.0.40
codegen_flags: <defaults>
</compile_context>

<pallas_src>
import numpy as np
import jax
import jax.numpy as jnp
from jax.experimental import pallas as pl
from jax.experimental.pallas import tpu as pltpu


# ----------------------------------------------------------------------------
# Pallas kernel: one label-homogeneous row tile of anchors vs the full queue.
#
# Matches the reference _contrastive() (non-pretrain path) exactly:
#   adc        = (anchor / temp) @ contrast.T          (temp folded on host)
#   logits     = adc - rowmax(adc)
#   nes        = sum_j exp(logits_j * (1 - mask_j))    ( = S + sum_neg exp(logits) )
#   log_prob_j = logits_j*mask_j - log(exp(logits_j*mask_j) + nes + 1e-10)
#   out[row]   = sum_j log_prob_j / S                  (S = cache_size = #positives)
# Because all rows in the tile share one class, the positive columns are the dense
# slab cp_ref (D, S); the (M - S) negative columns each contribute the per-row
# constant -log(1 + nes + 1e-10), so the per-element log runs on (TM, S) only.
# ----------------------------------------------------------------------------
def _contrastive_row_kernel(cls_ref, a_ref, ct_ref, cp_ref, o_ref):
    del cls_ref                                # consumed by the index_maps only
    m_count = ct_ref.shape[-1]                 # total queue columns
    s_count = cp_ref.shape[-1]                 # cache_size == positives per row

    a = a_ref[...]                             # (TM, D) bf16, pre-scaled by 1/temp
    ct = ct_ref[...]                           # (D, M)  bf16, resident queue
    cp = cp_ref[0]                             # (D, S)  bf16, this tile's positive slab

    # Full-queue scores: one MXU matmul + ONE exp pass over (TM, M).
    s_full = jnp.dot(a, ct, preferred_element_type=jnp.float32)        # (TM, M)
    row_max = jnp.max(s_full, axis=-1, keepdims=True)                  # (TM, 1)
    e_full = jnp.exp(s_full - row_max)                                  # (TM, M)
    tot_exp = jnp.sum(e_full, axis=-1, keepdims=True)                   # (TM, 1)

    # Positive slab only: exp + log over (TM, S) instead of (TM, M).
    s_pos = jnp.dot(a, cp, preferred_element_type=jnp.float32) - row_max  # (TM, S)
    e_pos = jnp.exp(s_pos)
    pos_exp_sum = jnp.sum(e_pos, axis=-1, keepdims=True)
    pos_logit_sum = jnp.sum(s_pos, axis=-1, keepdims=True)

    # Reference's neg_exp_logits_sum = sum_neg exp(logits) + exp(0)=1 per positive col.
    nes = (tot_exp - pos_exp_sum) + float(s_count)

    pos_log_sum = jnp.sum(jnp.log(e_pos + nes + 1e-10), axis=-1, keepdims=True)
    neg_cols = float(m_count - s_count)
    log_prob_sum = pos_logit_sum - pos_log_sum - neg_cols * jnp.log(1.0 + nes + 1e-10)

    mlp = log_prob_sum * (1.0 / float(s_count))                         # (TM, 1)
    # Lane-dense store: broadcast the per-row scalar across 128 lanes (unmasked vst).
    o_ref[...] = jnp.broadcast_to(mlp, o_ref.shape)


# ----------------------------------------------------------------------------
# Generation-aware sizing helpers.
# ----------------------------------------------------------------------------
def _round_up(x, m):
    return ((x + m - 1) // m) * m


def _tpu_vmem_bytes():
    """Physical VMEM per core (v5e/v6e: 128 MiB, v7x: 64 MiB); safe fallback."""
    try:
        return int(pltpu.get_tpu_info().vmem_capacity_bytes)
    except Exception:
        return 128 * 1024 * 1024


def _choose_tm(max_rows_per_label, m_count, vmem_cap):
    """Largest label-homogeneous row tile that keeps ~6 live (TM, M) f32 slabs
    within ~1/8 of this generation's physical VMEM (half-size on v7x)."""
    cap = (vmem_cap // 8) // max(6 * m_count * 4, 1)
    cap = max(8, min((int(cap) // 8) * 8, 256))
    return min(_round_up(max(max_rows_per_label, 1), 8), cap)


def _derived_vmem_limit(tm, d, m_count, s_count, vmem_cap):
    block_bytes = (2 * tm * d * 2            # anchor block (double-buffered bf16)
                   + 2 * d * m_count * 2     # resident queue (worst case 2 bufs)
                   + 2 * d * s_count * 2     # positive slab
                   + 2 * tm * 128 * 4)       # lane-dense output block
    temp_bytes = 8 * tm * m_count * 4        # live f32 temporaries (generous)
    need = block_bytes + temp_bytes + (4 << 20)          # + compiler scratch headroom
    return int(min(max(32 << 20, 2 * need), int(vmem_cap * 0.75)))


# ----------------------------------------------------------------------------
# pallas_call wrapper.
# ----------------------------------------------------------------------------
def contrastive_mean_log_prob(tile_cls, anchor, contrast_t, contrast_pos, tm, vmem_cap):
    na_pad, d = anchor.shape
    m_count = contrast_t.shape[1]
    num_class, _, s_count = contrast_pos.shape
    num_tiles = na_pad // tm
    assert na_pad % tm == 0 and tile_cls.shape[0] == num_tiles

    # TODO(synk): for very large queues (M such that (TM, M) f32 temporaries no longer
    # fit v7x's 64 MiB VMEM) add a second, last, "arbitrary" grid axis over M with an
    # online-softmax accumulator (running row-max / neg-sum) in VMEM scratch.
    cost = pl.CostEstimate(
        flops=2 * na_pad * d * (m_count + s_count),
        transcendentals=na_pad * (m_count + 2 * s_count + 1),
        bytes_accessed=(na_pad * d * 2 + d * m_count * 2
                        + num_class * d * s_count * 2
                        + na_pad * 128 * 4 + num_tiles * 4))

    def build(single_buffer_resident):
        ct_kwargs = {}
        if single_buffer_resident:
            ct_kwargs = dict(pipeline_mode=pl.Buffered(1))   # resident block never changes
        return pl.pallas_call(
            _contrastive_row_kernel,
            out_shape=jax.ShapeDtypeStruct((na_pad, 128), jnp.float32),
            grid_spec=pltpu.PrefetchScalarGridSpec(
                num_scalar_prefetch=1,
                grid=(num_tiles,),
                in_specs=[
                    pl.BlockSpec((tm, d), lambda i, cls: (i, 0)),           # anchor rows
                    pl.BlockSpec((d, m_count), lambda i, cls: (0, 0),       # queue (resident)
                                 **ct_kwargs),
                    pl.BlockSpec((1, d, s_count),                           # positive slab
                                 lambda i, cls: (cls[i], 0, 0)),
                ],
                out_specs=pl.BlockSpec((tm, 128), lambda i, cls: (i, 0)),
            ),
            compiler_params=pltpu.CompilerParams(
                dimension_semantics=("parallel",),
                vmem_limit_bytes=_derived_vmem_limit(tm, d, m_count, s_count, vmem_cap)),
            cost_estimate=cost,
        )

    try:
        return build(True)(tile_cls, anchor, contrast_t, contrast_pos)
    except Exception:
        # TODO(synk): pl.Buffered(1) not accepted by this jax version; fall back to
        # default double-buffering of the resident queue block.
        return build(False)(tile_cls, anchor, contrast_t, contrast_pos)


# ----------------------------------------------------------------------------
# Host-side glue: deterministic anchor sampling (mirrors _anchor_sampling).
# ----------------------------------------------------------------------------
def _anchor_sampling_np(X, y_hat, max_samples, max_views, ignore_label=-1, seed=0):
    rng = np.random.RandomState(seed)
    batch_size, feat_dim = X.shape[0], X.shape[-1]
    classes, total_classes = [], 0
    for ii in range(batch_size):
        this_y = y_hat[ii]
        uniq = np.unique(this_y)
        cls = [int(c) for c in uniq
               if c != ignore_label and int((this_y == c).sum()) > max_views]
        classes.append(cls)
        total_classes += len(cls)
    if total_classes == 0:
        return None, None
    n_view = min(max_samples // total_classes, max_views)
    X_ = np.zeros((total_classes, n_view, feat_dim), dtype=np.float32)
    y_ = np.zeros((total_classes,), dtype=np.float32)
    ptr = 0
    for ii in range(batch_size):
        this_y_hat = y_hat[ii]
        for cls_id in classes[ii]:
            indices = np.nonzero(this_y_hat == cls_id)[0]
            keep = min(indices.shape[0], n_view)
            perm = rng.permutation(indices.shape[0])
            sampled = indices[perm[:keep]]
            X_[ptr, :keep, :] = X[ii, sampled, :]
            y_[ptr] = cls_id
            ptr += 1
    # F.normalize(X_, dim=-1)
    X_ = X_ / np.maximum(np.linalg.norm(X_, axis=-1, keepdims=True), 1e-12)
    return X_, y_


def server_pixel_contrast_loss(feats, predict, queue_feats, *,
                               temperature, base_temperature,
                               max_samples, max_views):
    """Train-mode forward of ServerPixelContrastLoss (queue-based negatives)."""
    B, C, H, W = feats.shape
    X = jnp.transpose(feats, (0, 2, 3, 1)).reshape(B, H * W, C)       # NCHW -> (B, HW, C)
    y_hat = predict.reshape(B, -1)

    # TODO(synk): randperm-based anchor sampling is data-dependent (dynamic shapes);
    # kept on host in numpy rather than inside the Pallas kernel.
    X_, y_ = _anchor_sampling_np(np.asarray(X), np.asarray(y_hat),
                                 max_samples, max_views)
    if X_ is None:
        return jnp.float32(0.0)
    total_classes, n_view, d = X_.shape

    num_class, cache_size, dq = queue_feats.shape
    assert dq == d
    m_count = num_class * cache_size

    # Queue -> bf16 FIRST (halves the relayout bytes), then the two kernel views.
    # TODO(synk): a real training loop should store the queue pre-transposed as
    # (D, M) / (num_class, D, S) bf16 so this per-call relayout disappears entirely.
    q_bf16 = jnp.asarray(queue_feats).astype(jnp.bfloat16)            # (num_class, S, D)
    contrast_t = jnp.transpose(q_bf16.reshape(m_count, d))            # (D, M)
    contrast_pos = jnp.transpose(q_bf16, (0, 2, 1))                   # (num_class, D, S)

    vmem_cap = _tpu_vmem_bytes()

    # Re-order anchors label-major (mean over rows is order-invariant) so every grid
    # tile is label-homogeneous; fold 1/temperature into the anchors here (free —
    # this array is being assembled in numpy anyway).
    labels = y_.astype(np.int32)
    uniq_labels, group_counts = np.unique(labels, return_counts=True)
    max_rows_per_label = int(group_counts.max()) * n_view
    tm = _choose_tm(max_rows_per_label, m_count, vmem_cap)

    inv_temp = np.float32(1.0 / temperature)
    anchor_chunks, tile_cls, valid_idx = [], [], []
    row_ptr = 0
    for c in uniq_labels:
        rows = X_[labels == c].reshape(-1, d) * inv_temp              # (rows_c, D)
        n_rows = rows.shape[0]
        n_tiles = -(-n_rows // tm)
        pad = n_tiles * tm - n_rows
        if pad:                                                       # padded rows: garbage, sliced off
            rows = np.pad(rows, ((0, pad), (0, 0)))
        anchor_chunks.append(rows)
        tile_cls.extend([int(c)] * n_tiles)
        valid_idx.extend(range(row_ptr, row_ptr + n_rows))
        row_ptr += n_tiles * tm

    anchor_np = np.concatenate(anchor_chunks, axis=0).astype(np.float32)
    tile_cls = jnp.asarray(np.asarray(tile_cls, dtype=np.int32))
    valid_idx = jnp.asarray(np.asarray(valid_idx, dtype=np.int32))
    anchor = jnp.asarray(anchor_np).astype(jnp.bfloat16)              # (Na_pad, D)

    mlp_wide = contrastive_mean_log_prob(tile_cls, anchor, contrast_t,
                                         contrast_pos, tm, vmem_cap)
    mean_log_prob = mlp_wide[:, 0][valid_idx]                         # valid rows only
    loss = jnp.mean(-(temperature / base_temperature) * mean_log_prob)
    return loss


# ----------------------------------------------------------------------------
# Float64 numpy transcription of the PyTorch _contrastive() for validation.
# ----------------------------------------------------------------------------
def _reference_loss_np(X_, y_, queue_feats, temperature, base_temperature):
    total_classes, n_view, d = X_.shape
    num_class, cache_size, _ = queue_feats.shape
    anchor = X_.transpose(1, 0, 2).reshape(n_view * total_classes, d).astype(np.float64)
    y_anchor = np.tile(y_, n_view).astype(np.float64)
    contrast = np.asarray(queue_feats, dtype=np.float64).reshape(num_class * cache_size, d)
    y_contrast = np.repeat(np.arange(num_class, dtype=np.float64), cache_size)

    adc = anchor @ contrast.T / temperature
    logits = adc - adc.max(axis=1, keepdims=True)
    mask = (y_anchor[:, None] == y_contrast[None, :]).astype(np.float64)
    pos_logits = logits * mask
    pos_exp = np.exp(pos_logits)
    neg_exp_sum = np.exp(logits * (1.0 - mask)).sum(axis=1, keepdims=True)
    log_prob = pos_logits - np.log(pos_exp + neg_exp_sum + 1e-10)
    mean_log_prob = log_prob.sum(1) / mask.sum(1)
    return float(np.mean(-(temperature / base_temperature) * mean_log_prob))


if __name__ == "__main__":
    # hyperparameters (the module's "args")
    NUM_CLASS = 4
    NUM_CLUSTER = 16
    NUM_SOURCE = 2          # len(args.source)
    MAX_SAMPLES = 64
    MAX_VIEWS = 16
    TEMPERATURE = 0.07
    BASE_TEMPERATURE = 0.07

    B, C, H, W = 2, 32, 16, 16   # feats: NCHW

    key = jax.random.PRNGKey(0)
    k1, k2, k3 = jax.random.split(key, 3)
    feats = jax.random.normal(k1, (B, C, H, W), dtype=jnp.float32)
    predict = jax.random.randint(k2, (B, H, W), 0, NUM_CLASS, dtype=jnp.int32)

    # synthetic queue memory: (num_class, cache_size, feat_dim), L2-normalized
    cache_size = NUM_CLUSTER * NUM_SOURCE
    qfeat = jax.random.normal(k3, (NUM_CLASS, cache_size, C), dtype=jnp.float32)
    qfeat = qfeat / jnp.maximum(
        jnp.linalg.norm(qfeat, axis=-1, keepdims=True), 1e-12)

    loss = server_pixel_contrast_loss(
        feats, predict, qfeat,
        temperature=TEMPERATURE, base_temperature=BASE_TEMPERATURE,
        max_samples=MAX_SAMPLES, max_views=MAX_VIEWS)
    loss = jax.block_until_ready(loss)
    assert not bool(jnp.isnan(loss)), "Server memory loss is nan"

    # Validate against the f64 reference math (bf16 MXU inputs -> loose tolerance).
    X_chk, y_chk = _anchor_sampling_np(
        np.asarray(jnp.transpose(feats, (0, 2, 3, 1)).reshape(B, H * W, C)),
        np.asarray(predict.reshape(B, -1)), MAX_SAMPLES, MAX_VIEWS)
    ref = _reference_loss_np(X_chk, y_chk, np.asarray(qfeat),
                             TEMPERATURE, BASE_TEMPERATURE)
    got = float(loss)
    assert abs(got - ref) <= 0.1 + 0.05 * abs(ref), (got, ref)
    print("KERNEL_OK")
</pallas_src>

<mosaic_0001>
module attributes {stable_mosaic.version = 11 : i64} {
  func.func @_contrastive_row_kernel(%arg0: i32, %arg1: memref<4xi32, #tpu.memory_space<smem>>, %arg2: memref<16x32xbf16, #tpu.memory_space<vmem>>, %arg3: memref<32x128xbf16, #tpu.memory_space<vmem>>, %arg4: memref<1x32x32xbf16, #tpu.memory_space<vmem>>, %arg5: memref<16x128xf32, #tpu.memory_space<vmem>>) attributes {dimension_semantics = [#tpu.dimension_semantics<parallel>], iteration_bounds = array<i64: 4>, scalar_prefetch = 1 : i64, scratch_operands = 0 : i64, tpu.core_type = #tpu.core_type<tc>, window_params = [{transform_indices = @transform_0, window_bounds = array<i64: 16, 32>}, {pipeline_mode = #tpu.pipeline_mode<synchronous>, transform_indices = @transform_1, window_bounds = array<i64: 32, 128>}, {transform_indices = @transform_2, window_bounds = array<i64: 1, 32, 32>}, {transform_indices = @transform_3, window_bounds = array<i64: 16, 128>}]} {
    %c0 = arith.constant 0 : index
    %c0_0 = arith.constant 0 : index
    %0 = vector.load %arg2[%c0, %c0_0] : memref<16x32xbf16, #tpu.memory_space<vmem>>, vector<16x32xbf16>
    %c0_1 = arith.constant 0 : index
    %c0_2 = arith.constant 0 : index
    %1 = vector.load %arg3[%c0_1, %c0_2] : memref<32x128xbf16, #tpu.memory_space<vmem>>, vector<32x128xbf16>
    %c0_3 = arith.constant 0 : index
    %c0_4 = arith.constant 0 : index
    %c0_5 = arith.constant 0 : index
    %2 = vector.load %arg4[%c0_3, %c0_4, %c0_5] : memref<1x32x32xbf16, #tpu.memory_space<vmem>>, vector<1x32x32xbf16>
    %3 = vector.shape_cast %2 : vector<1x32x32xbf16> to vector<32x32xbf16>
    %cst = arith.constant dense<0.000000e+00> : vector<16x128xf32>
    %4 = tpu.matmul %0, %1, %cst {dimension_numbers = #tpu.dot_dimension_numbers<[1], [0], [0], [1], [0, 0, 1, 1], [], []>} : vector<16x32xbf16>, vector<32x128xbf16>, vector<16x128xf32> -> vector<16x128xf32>
    %cst_6 = arith.constant dense<0xFF800000> : vector<16xf32>
    %5 = vector.multi_reduction <maximumf>, %4, %cst_6 [1] : vector<16x128xf32> to vector<16xf32>
    %6 = vector.shape_cast %5 : vector<16xf32> to vector<16x1xf32>
    %7 = vector.broadcast %6 : vector<16x1xf32> to vector<16x128xf32>
    %8 = arith.subf %4, %7 : vector<16x128xf32>
    %9 = math.exp %8 : vector<16x128xf32>
    %cst_7 = arith.constant dense<0.000000e+00> : vector<16xf32>
    %10 = vector.multi_reduction <add>, %9, %cst_7 [1] : vector<16x128xf32> to vector<16xf32>
    %11 = vector.shape_cast %10 : vector<16xf32> to vector<16x1xf32>
    %cst_8 = arith.constant dense<0.000000e+00> : vector<16x32xf32>
    %12 = tpu.matmul %0, %3, %cst_8 {dimension_numbers = #tpu.dot_dimension_numbers<[1], [0], [0], [1], [0, 0, 1, 1], [], []>} : vector<16x32xbf16>, vector<32x32xbf16>, vector<16x32xf32> -> vector<16x32xf32>
    %13 = vector.broadcast %6 : vector<16x1xf32> to vector<16x32xf32>
    %14 = arith.subf %12, %13 : vector<16x32xf32>
    %15 = math.exp %14 : vector<16x32xf32>
    %cst_9 = arith.constant dense<0.000000e+00> : vector<16xf32>
    %16 = vector.multi_reduction <add>, %15, %cst_9 [1] : vector<16x32xf32> to vector<16xf32>
    %17 = vector.shape_cast %16 : vector<16xf32> to vector<16x1xf32>
    %cst_10 = arith.constant dense<0.000000e+00> : vector<16xf32>
    %18 = vector.multi_reduction <add>, %14, %cst_10 [1] : vector<16x32xf32> to vector<16xf32>
    %19 = vector.shape_cast %18 : vector<16xf32> to vector<16x1xf32>
    %20 = arith.subf %11, %17 : vector<16x1xf32>
    %cst_11 = arith.constant 3.200000e+01 : f32
    %21 = vector.broadcast %cst_11 : f32 to vector<16x1xf32>
    %22 = arith.addf %20, %21 : vector<16x1xf32>
    %23 = vector.broadcast %22 : vector<16x1xf32> to vector<16x32xf32>
    %24 = arith.addf %15, %23 : vector<16x32xf32>
    %cst_12 = arith.constant 1.000000e-10 : f32
    %25 = vector.broadcast %cst_12 : f32 to vector<16x32xf32>
    %26 = arith.addf %24, %25 : vector<16x32xf32>
    %27 = math.log %26 : vector<16x32xf32>
    %cst_13 = arith.constant dense<0.000000e+00> : vector<16xf32>
    %28 = vector.multi_reduction <add>, %27, %cst_13 [1] : vector<16x32xf32> to vector<16xf32>
    %29 = vector.shape_cast %28 : vector<16xf32> to vector<16x1xf32>
    %30 = arith.subf %19, %29 : vector<16x1xf32>
    %cst_14 = arith.constant 1.000000e+00 : f32
    %31 = vector.broadcast %cst_14 : f32 to vector<16x1xf32>
    %32 = arith.addf %31, %22 : vector<16x1xf32>
    %cst_15 = arith.constant 1.000000e-10 : f32
    %33 = vector.broadcast %cst_15 : f32 to vector<16x1xf32>
    %34 = arith.addf %32, %33 : vector<16x1xf32>
    %35 = math.log %34 : vector<16x1xf32>
    %cst_16 = arith.constant 9.600000e+01 : f32
    %36 = vector.broadcast %cst_16 : f32 to vector<16x1xf32>
    %37 = arith.mulf %36, %35 : vector<16x1xf32>
    %38 = arith.subf %30, %37 : vector<16x1xf32>
    %cst_17 = arith.constant 3.125000e-02 : f32
    %39 = vector.broadcast %cst_17 : f32 to vector<16x1xf32>
    %40 = arith.mulf %38, %39 : vector<16x1xf32>
    %41 = vector.shape_cast %40 : vector<16x1xf32> to vector<16x1xf32>
    %42 = vector.broadcast %41 : vector<16x1xf32> to vector<16x128xf32>
    %c0_18 = arith.constant 0 : index
    %c0_19 = arith.constant 0 : index
    %43 = vector.load %arg5[%c0_18, %c0_19] : memref<16x128xf32, #tpu.memory_space<vmem>>, vector<16x128xf32>
    tpu.vector_store %arg5[%c0_18, %c0_19], %42 {strides = array<i32>} : memref<16x128xf32, #tpu.memory_space<vmem>>, vector<16x128xf32>,
    return
  }
  func.func @transform_0(%arg0: i32, %arg1: memref<4xi32, #tpu.memory_space<smem>>) -> (i32, i32) {
    %c0_i32 = arith.constant 0 : i32
    %c0_i32_0 = arith.constant 0 : i32
    return %arg0, %c0_i32 : i32, i32
  }
  func.func @transform_1(%arg0: i32, %arg1: memref<4xi32, #tpu.memory_space<smem>>) -> (i32, i32) {
    %c0_i32 = arith.constant 0 : i32
    %c0_i32_0 = arith.constant 0 : i32
    %c0_i32_1 = arith.constant 0 : i32
    return %c0_i32, %c0_i32_0 : i32, i32
  }
  func.func @transform_2(%arg0: i32, %arg1: memref<4xi32, #tpu.memory_space<smem>>) -> (i32, i32, i32) {
    %0 = arith.index_cast %arg0 : i32 to index
    %1 = memref.load %arg1[%0] : memref<4xi32, #tpu.memory_space<smem>>
    %c0_i32 = arith.constant 0 : i32
    %c0_i32_0 = arith.constant 0 : i32
    %c0_i32_1 = arith.constant 0 : i32
    return %1, %c0_i32, %c0_i32_0 : i32, i32, i32
  }
  func.func @transform_3(%arg0: i32, %arg1: memref<4xi32, #tpu.memory_space<smem>>) -> (i32, i32) {
    %c0_i32 = arith.constant 0 : i32
    %c0_i32_0 = arith.constant 0 : i32
    return %arg0, %c0_i32 : i32, i32
  }
}

module attributes {stable_mosaic.version = 11 : i64} {
  func.func @_contrastive_row_kernel(%arg0: i32, %arg1: memref<4xi32, #tpu.memory_space<smem>>, %arg2: memref<16x32xbf16, #tpu.memory_space<vmem>>, %arg3: memref<32x128xbf16, #tpu.memory_space<vmem>>, %arg4: memref<1x32x32xbf16, #tpu.memory_space<vmem>>, %arg5: memref<16x128xf32, #tpu.memory_space<vmem>>) attributes {dimension_semantics = [#tpu.dimension_semantics<parallel>], iteration_bounds = array<i64: 4>, scalar_prefetch = 1 : i64, scratch_operands = 0 : i64, tpu.core_type = #tpu.core_type<tc>, window_params = [{transform_indices = @transform_0, window_bounds = array<i64: 16, 32>}, {pipeline_mode = #tpu.pipeline_mode<synchronous>, transform_indices = @transform_1, window_bounds = array<i64: 32, 128>}, {transform_indices = @transform_2, window_bounds = array<i64: 1, 32, 32>}, {transform_indices = @transform_3, window_bounds = array<i64: 16, 128>}]} {
    %c0 = arith.constant 0 : index
    %c0_0 = arith.constant 0 : index
    %0 = vector.load %arg2[%c0, %c0_0] : memref<16x32xbf16, #tpu.memory_space<vmem>>, vector<16x32xbf16>
    %c0_1 = arith.constant 0 : index
    %c0_2 = arith.constant 0 : index
    %1 = vector.load %arg3[%c0_1, %c0_2] : memref<32x128xbf16, #tpu.memory_space<vmem>>, vector<32x128xbf16>
    %c0_3 = arith.constant 0 : index
    %c0_4 = arith.constant 0 : index
    %c0_5 = arith.constant 0 : index
    %2 = vector.load %arg4[%c0_3, %c0_4, %c0_5] : memref<1x32x32xbf16, #tpu.memory_space<vmem>>, vector<1x32x32xbf16>
    %3 = vector.shape_cast %2 : vector<1x32x32xbf16> to vector<32x32xbf16>
    %cst = arith.constant dense<0.000000e+00> : vector<16x128xf32>
    %4 = tpu.matmul %0, %1, %cst {dimension_numbers = #tpu.dot_dimension_numbers<[1], [0], [0], [1], [0, 0, 1, 1], [], []>} : vector<16x32xbf16>, vector<32x128xbf16>, vector<16x128xf32> -> vector<16x128xf32>
    %cst_6 = arith.constant dense<0xFF800000> : vector<16xf32>
    %5 = vector.multi_reduction <maximumf>, %4, %cst_6 [1] : vector<16x128xf32> to vector<16xf32>
    %6 = vector.shape_cast %5 : vector<16xf32> to vector<16x1xf32>
    %7 = vector.broadcast %6 : vector<16x1xf32> to vector<16x128xf32>
    %8 = arith.subf %4, %7 : vector<16x128xf32>
    %9 = math.exp %8 : vector<16x128xf32>
    %cst_7 = arith.constant dense<0.000000e+00> : vector<16xf32>
    %10 = vector.multi_reduction <add>, %9, %cst_7 [1] : vector<16x128xf32> to vector<16xf32>
    %11 = vector.shape_cast %10 : vector<16xf32> to vector<16x1xf32>
    %cst_8 = arith.constant dense<0.000000e+00> : vector<16x32xf32>
    %12 = tpu.matmul %0, %3, %cst_8 {dimension_numbers = #tpu.dot_dimension_numbers<[1], [0], [0], [1], [0, 0, 1, 1], [], []>} : vector<16x32xbf16>, vector<32x32xbf16>, vector<16x32xf32> -> vector<16x32xf32>
    %13 = vector.broadcast %6 : vector<16x1xf32> to vector<16x32xf32>
    %14 = arith.subf %12, %13 : vector<16x32xf32>
    %15 = math.exp %14 : vector<16x32xf32>
    %cst_9 = arith.constant dense<0.000000e+00> : vector<16xf32>
    %16 = vector.multi_reduction <add>, %15, %cst_9 [1] : vector<16x32xf32> to vector<16xf32>
    %17 = vector.shape_cast %16 : vector<16xf32> to vector<16x1xf32>
    %cst_10 = arith.constant dense<0.000000e+00> : vector<16xf32>
    %18 = vector.multi_reduction <add>, %14, %cst_10 [1] : vector<16x32xf32> to vector<16xf32>
    %19 = vector.shape_cast %18 : vector<16xf32> to vector<16x1xf32>
    %20 = arith.subf %11, %17 : vector<16x1xf32>
    %cst_11 = arith.constant 3.200000e+01 : f32
    %21 = vector.broadcast %cst_11 : f32 to vector<16x1xf32>
    %22 = arith.addf %20, %21 : vector<16x1xf32>
    %23 = vector.broadcast %22 : vector<16x1xf32> to vector<16x32xf32>
    %24 = arith.addf %15, %23 : vector<16x32xf32>
    %cst_12 = arith.constant 1.000000e-10 : f32
    %25 = vector.broadcast %cst_12 : f32 to vector<16x32xf32>
    %26 = arith.addf %24, %25 : vector<16x32xf32>
    %27 = math.log %26 : vector<16x32xf32>
    %cst_13 = arith.constant dense<0.000000e+00> : vector<16xf32>
    %28 = vector.multi_reduction <add>, %27, %cst_13 [1] : vector<16x32xf32> to vector<16xf32>
    %29 = vector.shape_cast %28 : vector<16xf32> to vector<16x1xf32>
    %30 = arith.subf %19, %29 : vector<16x1xf32>
    %cst_14 = arith.constant 1.000000e+00 : f32
    %31 = vector.broadcast %cst_14 : f32 to vector<16x1xf32>
    %32 = arith.addf %31, %22 : vector<16x1xf32>
    %cst_15 = arith.constant 1.000000e-10 : f32
    %33 = vector.broadcast %cst_15 : f32 to vector<16x1xf32>
    %34 = arith.addf %32, %33 : vector<16x1xf32>
    %35 = math.log %34 : vector<16x1xf32>
    %cst_16 = arith.constant 9.600000e+01 : f32
    %36 = vector.broadcast %cst_16 : f32 to vector<16x1xf32>
    %37 = arith.mulf %36, %35 : vector<16x1xf32>
    %38 = arith.subf %30, %37 : vector<16x1xf32>
    %cst_17 = arith.constant 3.125000e-02 : f32
    %39 = vector.broadcast %cst_17 : f32 to vector<16x1xf32>
    %40 = arith.mulf %38, %39 : vector<16x1xf32>
    %41 = vector.shape_cast %40 : vector<16x1xf32> to vector<16x1xf32>
    %42 = vector.broadcast %41 : vector<16x1xf32> to vector<16x128xf32>
    %c0_18 = arith.constant 0 : index
    %c0_19 = arith.constant 0 : index
    %43 = vector.load %arg5[%c0_18, %c0_19] : memref<16x128xf32, #tpu.memory_space<vmem>>, vector<16x128xf32>
    tpu.vector_store %arg5[%c0_18, %c0_19], %42 {strides = array<i32>} : memref<16x128xf32, #tpu.memory_space<vmem>>, vector<16x128xf32>,
    return
  }
  func.func @transform_0(%arg0: i32, %arg1: memref<4xi32, #tpu.memory_space<smem>>) -> (i32, i32) {
    %c0_i32 = arith.constant 0 : i32
    %c0_i32_0 = arith.constant 0 : i32
    return %arg0, %c0_i32 : i32, i32
  }
  func.func @transform_1(%arg0: i32, %arg1: memref<4xi32, #tpu.memory_space<smem>>) -> (i32, i32) {
    %c0_i32 = arith.constant 0 : i32
    %c0_i32_0 = arith.constant 0 : i32
    %c0_i32_1 = arith.constant 0 : i32
    return %c0_i32, %c0_i32_0 : i32, i32
  }
  func.func @transform_2(%arg0: i32, %arg1: memref<4xi32, #tpu.memory_space<smem>>) -> (i32, i32, i32) {
    %0 = arith.index_cast %arg0 : i32 to index
    %1 = memref.load %arg1[%0] : memref<4xi32, #tpu.memory_space<smem>>
    %c0_i32 = arith.constant 0 : i32
    %c0_i32_0 = arith.constant 0 : i32
    %c0_i32_1 = arith.constant 0 : i32
    return %1, %c0_i32, %c0_i32_0 : i32, i32, i32
  }
  func.func @transform_3(%arg0: i32, %arg1: memref<4xi32, #tpu.memory_space<smem>>) -> (i32, i32) {
    %c0_i32 = arith.constant 0 : i32
    %c0_i32_0 = arith.constant 0 : i32
    return %arg0, %c0_i32 : i32, i32
  }
}

</mosaic_0001>

<llo_original>
// kernel: tpu_custom_call.1
$region0: #{tpu_custom_call.1}
  #allocation0 [shape = 'u32[]', space=smem, size = 0x4, offset = 0x4, fixed_abs, tag = 'smem constant byte address 0x4 - core index']
  #allocation1 [shape = 'u32[144,128]{1,0:T(1,128)}', space=vmem, size = 0x12000, scoped, tag = 'internal scratch']
  #allocation2 [shape = 's32[1]{0}', space=sflag, size = 0x4, scoped, tag = 'scoped memory for tpu_custom_call.1']
  #allocation3 [shape = 'u8[512]{0}', space=smem, size = 0x200, scoped, tag = 'prefetched SMEM operand 0']
  %s0 = inlined_call_operand.vmem [shape: s32[4], index: 0, kind: input, shape index: {}]
  %s1 = inlined_call_operand.vmem [shape: bf16[64,32], index: 1, kind: input, shape index: {}]
  %s2 = inlined_call_operand.vmem [shape: bf16[32,128], index: 2, kind: input, shape index: {}]
  %s3 = inlined_call_operand.hbm [shape: bf16[4,32,32], index: 3, kind: input, shape index: {}]
  %s4 = inlined_call_operand.hbm [shape: f32[64,128], index: 4, kind: output, shape index: {}]
  %s5 = sld [smem:[#allocation0]]
  $region49: #{tpu_custom_call.1} parent=0
    _
  %s7 = ssub.s32 1, %s5
  %s8 = scalar_select 0, %s7, %s5
  %s9 = sshll.u32 %s0, 4
  %s10 = int_to_ptr.vmem [resolvable:$true] %s9
  %12 = dma.vmem_to_smem %s10, 16, [#allocation3], [#allocation2]
  %13 = dma.done [#allocation2], 16
  %14 = sfence
  $region1: #{tpu_custom_call.1} parent=0
    #allocation4 [shape = 'u8[16384]{0}', space=vmem, size = 0x4000, scoped, tag = 'input window, operand 3']
    #allocation5 [shape = 's32[2]{0}', space=sflag, size = 0x8, scoped, tag = 'scoped memory for tpu_custom_call.1']
    #allocation6 [shape = 's32[2]{0}', space=sflag, size = 0x8, scoped, tag = 'scoped memory for tpu_custom_call.1']
    #allocation7 [shape = 'u8[16384]{0}', space=vmem, size = 0x4000, scoped, tag = 'output window, operand 0']
    %15 = vsyncpa [#allocation5], 0
    %s16 = scalar_lea.sflag [#allocation5], 1
    %17 = vsyncpa %s16, 0
    %18 = vsyncpa [#allocation6], 0
    %s19 = scalar_lea.sflag [#allocation6], 1
    %20 = vsyncpa %s19, 0
    loop: start=0, step=1, limit=6
    $region2: #{tpu_custom_call.1} parent=1 // loop_pre_header
      _
    $region3: #{tpu_custom_call.1} parent=1 // loop_header
      %s22 = sphi 0, %s26
      %p23 = scmp.ge.s32.totalorder %s22, 6
      %s32 = sphi 0, %s34
      %s35 = sphi 0, %s32
      %s36 = sphi 0, %s35
      %s52 = sphi 0, %s36
      %s56 = sphi 0, %s56
      %s58 = sphi 0, %s56
      %s59 = sphi 0, %s58
      %s73 = sphi 0, %s59
      %s81 = sphi 0, %s83
      %s84 = sphi 0, %s81
      %s85 = sphi 0, %s84
      %s101 = sphi 0, %s85
      %s107 = sphi 0, %s109
      %s110 = sphi 0, %s107
      %s111 = sphi 0, %s110
      %s127 = sphi 0, %s111
    $region4: #{tpu_custom_call.1} parent=1 // loop_header_branch
      %25 = sbr.rel (%p23) target = $region8
    $region5: #{tpu_custom_call.1} parent=1 // loop_body
      %s27 = ssub.s32 %s22, 1
      %s28 = ssub.s32 %s22, 2
      %s29 = sadd.s32 %s22, 1
      %s30 = ssub.s32 %s22, %s29
      %p31 = scmp.eq.s32.totalorder %s30, 0
      %s33 = sadd.s32 %s32, 1
      %s34 = scalar_select %p31, %s32, %s33
      %p37 = pneg %p31
      %p38 = scmp.eq.s32.totalorder %s22, 3
      %p39 = por %p37, %p38
      %p40 = scmp.ne.s32.totalorder %s32, %s35
      %p41 = scmp.eq.s32.totalorder %s22, 0
      %p42 = por %p40, %p41
      %p43 = scmp.ne.s32.totalorder %s32, %s35
      %p44 = scmp.eq.s32.totalorder %s27, 3
      %p45 = por %p43, %p44
      %p46 = scmp.ne.s32.totalorder %s35, %s36
      %p47 = scmp.eq.s32.totalorder %s27, 0
      %p48 = por %p46, %p47
      %p49 = scmp.ne.s32.totalorder %s35, %s36
      %p50 = scmp.eq.s32.totalorder %s28, 3
      %p51 = por %p49, %p50
      %p53 = scmp.ne.s32.totalorder %s36, %s52
      %p54 = scmp.eq.s32.totalorder %s28, 0
      %p55 = por %p53, %p54
      %s57 = sadd.s32 %s56, 1
      %p60 = scmp.eq.s32.totalorder %s22, 3
      %p61 = scmp.ne.s32.totalorder %s56, %s58
      %p62 = scmp.eq.s32.totalorder %s22, 0
      %p63 = por %p61, %p62
      %p64 = scmp.ne.s32.totalorder %s56, %s58
      %p65 = scmp.eq.s32.totalorder %s27, 3
      %p66 = por %p64, %p65
      %p67 = scmp.ne.s32.totalorder %s58, %s59
      %p68 = scmp.eq.s32.totalorder %s27, 0
      %p69 = por %p67, %p68
      %p70 = scmp.ne.s32.totalorder %s58, %s59
      %p71 = scmp.eq.s32.totalorder %s28, 3
      %p72 = por %p70, %p71
      %p74 = scmp.ne.s32.totalorder %s59, %s73
      %p75 = scmp.eq.s32.totalorder %s28, 0
      %p76 = por %p74, %p75
      %s77 = sld [smem:[#allocation3 + %s22]]
      %s78 = sld [smem:[#allocation3 + %s29]]
      %s79 = ssub.s32 %s77, %s78
      %p80 = scmp.eq.s32.totalorder %s79, 0
      %s82 = sadd.s32 %s81, 1
      %s83 = scalar_select %p80, %s81, %s82
      %p86 = pneg %p80
      %p87 = scmp.eq.s32.totalorder %s22, 3
      %p88 = por %p86, %p87
      %p89 = scmp.ne.s32.totalorder %s81, %s84
      %p90 = scmp.eq.s32.totalorder %s22, 0
      %p91 = por %p89, %p90
      %p92 = scmp.ne.s32.totalorder %s81, %s84
      %p93 = scmp.eq.s32.totalorder %s27, 3
      %p94 = por %p92, %p93
      %p95 = scmp.ne.s32.totalorder %s84, %s85
      %p96 = scmp.eq.s32.totalorder %s27, 0
      %p97 = por %p95, %p96
      %p98 = scmp.ne.s32.totalorder %s84, %s85
      %p99 = scmp.eq.s32.totalorder %s28, 3
      %p100 = por %p98, %p99
      %p102 = scmp.ne.s32.totalorder %s85, %s101
      %p103 = scmp.eq.s32.totalorder %s28, 0
      %p104 = por %p102, %p103
      %s105 = ssub.s32 %s22, %s29
      %p106 = scmp.eq.s32.totalorder %s105, 0
      %s108 = sadd.s32 %s107, 1
      %s109 = scalar_select %p106, %s107, %s108
      %p112 = pneg %p106
      %p113 = scmp.eq.s32.totalorder %s22, 3
      %p114 = por %p112, %p113
      %p115 = scmp.ne.s32.totalorder %s107, %s110
      %p116 = scmp.eq.s32.totalorder %s22, 0
      %p117 = por %p115, %p116
      %p118 = scmp.ne.s32.totalorder %s107, %s110
      %p119 = scmp.eq.s32.totalorder %s27, 3
      %p120 = por %p118, %p119
      %p121 = scmp.ne.s32.totalorder %s110, %s111
      %p122 = scmp.eq.s32.totalorder %s27, 0
      %p123 = por %p121, %p122
      %p124 = scmp.ne.s32.totalorder %s110, %s111
      %p125 = scmp.eq.s32.totalorder %s28, 3
      %p126 = por %p124, %p125
      %p128 = scmp.ne.s32.totalorder %s111, %s127
      %p129 = scmp.eq.s32.totalorder %s28, 0
      %p130 = por %p128, %p129
      %p131 = scmp.le.s32.totalorder 1, %s22
      %p132 = scmp.lt.s32.totalorder %s22, 5
      %p133 = pnand %p131, %p132
      %p134 = pneg %p133
      // Predicated region
      $region9: #{tpu_custom_call.1} parent=5 // pred_check
        _
      $region10: #{tpu_custom_call.1} parent=5 // pred_check_branch
        %136 = sbr.rel (%p133) target = $region12
      $region11: #{tpu_custom_call.1} parent=5 // pred_region
        %s137 = ssub.s32 %s22, 1
        // Predicated region
        $region13: #{tpu_custom_call.1} parent=11 // pred_check
          %p138 = pneg %p69
        $region14: #{tpu_custom_call.1} parent=11 // pred_check_branch
          %140 = sbr.rel (%p138) target = $region16
        $region15: #{tpu_custom_call.1} parent=11 // pred_region
          _
        $region16: #{tpu_custom_call.1} parent=11 // pred_fallthru
          _
      $region12: #{tpu_custom_call.1} parent=5 // pred_fallthru
        _
      %p141 = scmp.lt.s32.totalorder %s22, 4
      // Predicated region
      $region17: #{tpu_custom_call.1} parent=5 // pred_check
        %p142 = pneg %p141
      $region18: #{tpu_custom_call.1} parent=5 // pred_check_branch
        %144 = sbr.rel (%p142) target = $region20
      $region19: #{tpu_custom_call.1} parent=5 // pred_region
        // Predicated region
        $region21: #{tpu_custom_call.1} parent=19 // pred_check
          %p145 = pneg %p42
        $region22: #{tpu_custom_call.1} parent=19 // pred_check_branch
          %147 = sbr.rel (%p145) target = $region24
        $region23: #{tpu_custom_call.1} parent=19 // pred_region
          %s148 = smul.u32 2, %s22
          %p149 = scmp.lt.s32.totalorder %s148, 7
          %s150 = scalar_select %p149, %s148, 7
          %s151 = smul.addr %s150, 4
          %s152 = scalar_lea.vmem %s1, %s151
          %s153 = smul.u32 2, %s22
        $region24: #{tpu_custom_call.1} parent=19 // pred_fallthru
          _
        // Predicated region
        $region25: #{tpu_custom_call.1} parent=19 // pred_check
          %p154 = pneg %p91
        $region26: #{tpu_custom_call.1} parent=19 // pred_check_branch
          %156 = sbr.rel (%p154) target = $region28
        $region27: #{tpu_custom_call.1} parent=19 // pred_region
          %s157 = sand.u32 %s81, 1
          %s158 = scalar_lea.sflag [#allocation5], %s157
          %s159 = sand.u32 %s81, 1
          %s160 = smul.addr %s159, 16
          %s161 = scalar_lea.vmem [#allocation4], %s160
          %s162 = sld [smem:[#allocation3 + %s22]]
          %s164 = ssub.s32 256, 256
          %165 = vsyncadd %s158, %s164
          %s166 = smul.addr %s162, 4
          %s167 = smul.addr %s166, 64
          %s168 = scalar_lea.hbm %s3, %s167
          %s169 = sshll.u32 %s161, 4
          %s170 = int_to_ptr.vmem [resolvable:$true] %s169
          %175 = dma.hbm_to_vmem [thread:$0]  %s168, 256, %s170, %s158, 64, 64, 4
        $region28: #{tpu_custom_call.1} parent=19 // pred_fallthru
          _
      $region20: #{tpu_custom_call.1} parent=5 // pred_fallthru
        _
      %p176 = scmp.le.s32.totalorder 1, %s22
      %p177 = scmp.lt.s32.totalorder %s22, 5
      %p178 = pnand %p176, %p177
      %p179 = pneg %p178
      // Predicated region
      $region29: #{tpu_custom_call.1} parent=5 // pred_check
        _
      $region30: #{tpu_custom_call.1} parent=5 // pred_check_branch
        %181 = sbr.rel (%p178) target = $region32
      $region31: #{tpu_custom_call.1} parent=5 // pred_region
        %s182 = ssub.s32 %s22, 1
        %s183 = sand.u32 %s84, 1
        %s184 = scalar_lea.sflag [#allocation5], %s183
        %s185 = sand.u32 %s84, 1
        %s186 = smul.addr %s185, 16
        %s187 = scalar_lea.vmem [#allocation4], %s186
        // Predicated region
        $region33: #{tpu_custom_call.1} parent=31 // pred_check
          %p188 = pneg %p97
        $region34: #{tpu_custom_call.1} parent=31 // pred_check_branch
          %190 = sbr.rel (%p188) target = $region36
        $region35: #{tpu_custom_call.1} parent=31 // pred_region
          %191 = dma.done %s184, 256
        $region36: #{tpu_custom_call.1} parent=31 // pred_fallthru
          _
        %s192 = smul.u32 2, %s27
        %p193 = scmp.lt.s32.totalorder %s192, 7
        %s194 = scalar_select %p193, %s192, 7
        %s195 = smul.addr %s194, 4
        %s196 = scalar_lea.vmem %s1, %s195
        %p197 = pneg %p48
        %p198 = pneg %p45
        %p199 = pneg %p69
        %p200 = pneg %p66
        %s201 = sand.u32 %s84, 1
        %s202 = scalar_lea.sflag [#allocation5], %s201
        %s203 = sand.u32 %s84, 1
        %s204 = smul.addr %s203, 16
        %s205 = scalar_lea.vmem [#allocation4], %s204
        %p206 = pneg %p97
        %p207 = pneg %p94
        %p208 = pneg %p123
        %p209 = pneg %p120
        %s210 = sand.u32 %s110, 1
        %s211 = scalar_lea.sflag [#allocation6], %s210
        %s212 = sand.u32 %s110, 1
        %s213 = smul.addr %s212, 16
        %s214 = scalar_lea.vmem [#allocation7], %s213
        %s215 = smul.u32 2, %s27
        %p216 = scmp.lt.s32.totalorder %s215, 7
        %s217 = scalar_select %p216, %s215, 7
        %s218 = smul.addr %s217, 4
        %s219 = scalar_lea.vmem %s1, %s218
        %s220 = smul.u32 2, %s27
        %s221 = sld [smem:[#allocation3 + %s27]]
        %s222 = smul.u32 2, %s27
        %v224 = vld [vmem:[%s219] sm:$0xf]
        %v225 = vld [vmem:[%s219 + $0x4] sm:$0xf]
        %v226 = vld [vmem:[%s2] sm:$0xf]
        %v227 = vld [vmem:[%s2 + $0x4] sm:$0xf]
        %v228 = vld [vmem:[%s2 + $0x8] sm:$0xf]
        %v229 = vld [vmem:[%s2 + $0xc] sm:$0xf]
        %v230 = vld [vmem:[%s187] sm:$0xf]
        %v231 = vld [vmem:[%s187 + $0x4] sm:$0xf]
        %v232 = vld [vmem:[%s187 + $0x8] sm:$0xf]
        %v233 = vld [vmem:[%s187 + $0xc] sm:$0xf]
        %v236 = vunpack.c.l.b16 %v224
        %v237 = vunpack.c.l.b16 %v225
        %v238 = vpack.c.b16 %v237, %v236
        %v243 = vunpack.c.l.b16 %v226
        %v244 = vunpack.c.l.b16 %v227
        %v245 = vunpack.c.l.b16 %v228
        %v246 = vunpack.c.l.b16 %v229
        %v247 = vpack.c.b16 %v244, %v243
        %v248 = vpack.c.b16 %v246, %v245
        %vm251 = vcmask 261120
        %v253 = vsel %vm251, %v238, 0
        %255 = vmatprep.subr.bf16.mxu0 0
        %256 = vmatpush1.bf16.msra.mxu0 %v247
        %257 = vmatprep.subr.bf16.mxu0 0
        %258 = vmatpush1.bf16.msra.mxu0 %v248
        %259 = vmatprep.subr.bf16.mxu0 0
        %260 = vmatpush1.bf16.msra.mxu0 0
        %261 = vmatprep.subr.bf16.mxu0 0
        %262 = vmatpush1.bf16.msra.mxu0 0
        %263 = vmatprep.subr.bf16.mxu0 0
        %264 = vmatpush1.bf16.msra.mxu0 0
        %265 = vmatprep.subr.bf16.mxu0 0
        %266 = vmatpush1.bf16.msra.mxu0 0
        %267 = vmatprep.subr.bf16.mxu0 0
        %268 = vmatpush1.bf16.msra.mxu0 0
        %269 = vmatprep.subr.bf16.mxu0 0
        %270 = vmatpush1.bf16.msra.mxu0 0
        %271 = vmatprep.subr.bf16.mxu0 0
        %272 = vmatpush1.bf16.msra.mxu0 0
        %273 = vmatprep.subr.bf16.mxu0 0
        %274 = vmatpush1.bf16.msra.mxu0 0
        %275 = vmatprep.subr.bf16.mxu0 0
        %276 = vmatpush1.bf16.msra.mxu0 0
        %277 = vmatprep.subr.bf16.mxu0 0
        %278 = vmatpush1.bf16.msra.mxu0 0
        %279 = vmatprep.subr.bf16.mxu0 0
        %280 = vmatpush1.bf16.msra.mxu0 0
        %281 = vmatprep.subr.bf16.mxu0 0
        %282 = vmatpush1.bf16.msra.mxu0 0
        %283 = vmatprep.subr.bf16.mxu0 0
        %284 = vmatpush1.bf16.msra.mxu0 0
        %285 = vmatprep.subr.bf16.mxu0 0
        %286 = vmatpush1.bf16.msra.mxu0 0
        %287 = vmatprep.mubr.bf16.mxu0 0
        %288 = vmatmul.mubr.bf16.gmra.mrb[0].mxu0 %v253
        %v289 = vpop.f32.mrb[0].mxu0
        %v290 = vadd.f32 0.0, %v289
        %v291 = vpop.f32.mrb[0].mxu0
        %v292 = vpop.f32.mrb[0].mxu0
        %v293 = vadd.f32 0.0, %v292
        %v294 = vpop.f32.mrb[0].mxu0
        %295 = vdwg.mxu0
        %296 = vmax.xlane.f32.xlu0 %v290
        %v297 = vpop.xlane.xlu0 %296
        %298 = vmax.xlane.f32.xlu0 %v293
        %v299 = vpop.xlane.xlu0 %298
        %v300 = vsub.f32 %v290, %v297
        %v301 = vsub.f32 %v293, %v299
        %v302 = vmul.f32 %v300, 1.442695
        %v303 = vpow.pop %v302
        %v304 = vmul.f32 %v301, 1.442695
        %v305 = vpow.pop %v304
        %306 = vadd.xlane.f32.xlu0 %v303
        %v307 = vpop.xlane.xlu0 %306
        %308 = vadd.xlane.f32.xlu0 %v305
        %v309 = vpop.xlane.xlu0 %308
        %v314 = vunpack.c.l.b16 %v230
        %v315 = vunpack.c.l.b16 %v231
        %v316 = vunpack.c.l.b16 %v232
        %v317 = vunpack.c.l.b16 %v233
        %v318 = vpack.c.b16 %v315, %v314
        %v319 = vpack.c.b16 %v317, %v316
        %322 = vmatprep.subr.bf16.mxu0 0
        %323 = vmatpush1.bf16.msra.mxu0 %v318
        %324 = vmatprep.subr.bf16.mxu0 0
        %325 = vmatpush1.bf16.msra.mxu0 %v319
        %326 = vmatprep.subr.bf16.mxu0 0
        %327 = vmatpush1.bf16.msra.mxu0 0
        %328 = vmatprep.subr.bf16.mxu0 0
        %329 = vmatpush1.bf16.msra.mxu0 0
        %330 = vmatprep.subr.bf16.mxu0 0
        %331 = vmatpush1.bf16.msra.mxu0 0
        %332 = vmatprep.subr.bf16.mxu0 0
        %333 = vmatpush1.bf16.msra.mxu0 0
        %334 = vmatprep.subr.bf16.mxu0 0
        %335 = vmatpush1.bf16.msra.mxu0 0
        %336 = vmatprep.subr.bf16.mxu0 0
        %337 = vmatpush1.bf16.msra.mxu0 0
        %338 = vmatprep.subr.bf16.mxu0 0
        %339 = vmatpush1.bf16.msra.mxu0 0
        %340 = vmatprep.subr.bf16.mxu0 0
        %341 = vmatpush1.bf16.msra.mxu0 0
        %342 = vmatprep.subr.bf16.mxu0 0
        %343 = vmatpush1.bf16.msra.mxu0 0
        %344 = vmatprep.subr.bf16.mxu0 0
        %345 = vmatpush1.bf16.msra.mxu0 0
        %346 = vmatprep.subr.bf16.mxu0 0
        %347 = vmatpush1.bf16.msra.mxu0 0
        %348 = vmatprep.subr.bf16.mxu0 0
        %349 = vmatpush1.bf16.msra.mxu0 0
        %350 = vmatprep.subr.bf16.mxu0 0
        %351 = vmatpush1.bf16.msra.mxu0 0
        %352 = vmatprep.subr.bf16.mxu0 0
        %353 = vmatpush1.bf16.msra.mxu0 0
        %354 = vmatprep.mubr.bf16.mxu0 0
        %355 = vmatmul.mubr.bf16.gmra.mrb[0].mxu0 %v253
        %v356 = vpop.f32.mrb[0].mxu0
        %v357 = vadd.f32 0.0, %v356
        %v358 = vpop.f32.mrb[0].mxu0
        %v359 = vpop.f32.mrb[0].mxu0
        %v360 = vadd.f32 0.0, %v359
        %v361 = vpop.f32.mrb[0].mxu0
        %362 = vdwg.mxu0
        %v363 = vsub.f32 %v357, %v297
        %v364 = vsub.f32 %v360, %v299
        %v365 = vmul.f32 %v363, 1.442695
        %v366 = vpow.pop %v365
        %v367 = vmul.f32 %v364, 1.442695
        %v368 = vpow.pop %v367
        %v369 = vsel %vm251, %v366, 0.0
        %370 = vadd.xlane.f32.xlu0 %v369
        %v371 = vpop.xlane.xlu0 %370
        %v372 = vsel %vm251, %v368, 0.0
        %373 = vadd.xlane.f32.xlu0 %v372
        %v374 = vpop.xlane.xlu0 %373
        %v375 = vsel %vm251, %v363, 0.0
        %376 = vadd.xlane.f32.xlu0 %v375
        %v377 = vpop.xlane.xlu0 %376
        %v378 = vsel %vm251, %v364, 0.0
        %379 = vadd.xlane.f32.xlu0 %v378
        %v380 = vpop.xlane.xlu0 %379
        %v381 = vsub.f32 %v307, %v371
        %v382 = vsub.f32 %v309, %v374
        %v383 = vadd.f32 %v381, 32.0
        %v384 = vadd.f32 %v382, 32.0
        %v385 = vadd.f32 %v366, %v383
        %v386 = vadd.f32 %v368, %v384
        %v387 = vadd.f32 %v385, 1e-10
        %v388 = vadd.f32 %v386, 1e-10
        %v389 = vlog2.pop %v387
        %v390 = vmul.f32 %v389, 0.6931472
        %v391 = vlog2.pop %v388
        %v392 = vmul.f32 %v391, 0.6931472
        %v393 = vsel %vm251, %v390, 0.0
        %394 = vadd.xlane.f32.xlu0 %v393
        %v395 = vpop.xlane.xlu0 %394
        %v396 = vsel %vm251, %v392, 0.0
        %397 = vadd.xlane.f32.xlu0 %v396
        %v398 = vpop.xlane.xlu0 %397
        %v399 = vsub.f32 %v377, %v395
        %v400 = vsub.f32 %v380, %v398
        %v401 = vadd.f32 %v383, 1.0
        %v402 = vadd.f32 %v384, 1.0
        %v403 = vadd.f32 %v401, 1e-10
        %v404 = vadd.f32 %v402, 1e-10
        %v405 = vlog2.pop %v403
        %v406 = vmul.f32 %v405, 0.6931472
        %v407 = vlog2.pop %v404
        %v408 = vmul.f32 %v407, 0.6931472
        %v409 = vmul.f32 %v406, 96.0
        %v410 = vmul.f32 %v408, 96.0
        %v411 = vsub.f32 %v399, %v409
        %v412 = vsub.f32 %v400, %v410
        %v413 = vmul.f32 %v411, 0.03125
        %v414 = vmul.f32 %v412, 0.03125
        %415 = vst [vmem:[%s214] sm:$0xff] %v413
        %416 = vst [vmem:[%s214 + $0x8] sm:$0xff] %v414
        %s417 = sand.u32 %s110, 1
        %s418 = scalar_lea.sflag [#allocation6], %s417
        %s419 = sand.u32 %s110, 1
        %s420 = smul.addr %s419, 16
        %s421 = scalar_lea.vmem [#allocation7], %s420
        // Predicated region
        $region37: #{tpu_custom_call.1} parent=31 // pred_check
          %p422 = pneg %p120
        $region38: #{tpu_custom_call.1} parent=31 // pred_check_branch
          %424 = sbr.rel (%p422) target = $region40
        $region39: #{tpu_custom_call.1} parent=31 // pred_region
          %s425 = smul.u32 2, %s27
          %s427 = ssub.s32 256, 256
          %428 = vsyncadd %s418, %s427
          %s429 = smul.addr %s425, 128
          %s430 = scalar_lea.hbm %s4, %s429
          %s431 = sshll.u32 %s421, 4
          %s432 = int_to_ptr.vmem [resolvable:$true] %s431
          %437 = dma.vmem_to_hbm [thread:$0]  %s432, 256, %s430, %s418, 128, 128, 8
        $region40: #{tpu_custom_call.1} parent=31 // pred_fallthru
          _
      $region32: #{tpu_custom_call.1} parent=5 // pred_fallthru
        _
      %p438 = scmp.le.s32.totalorder 2, %s22
      // Predicated region
      $region41: #{tpu_custom_call.1} parent=5 // pred_check
        %p439 = pneg %p438
      $region42: #{tpu_custom_call.1} parent=5 // pred_check_branch
        %441 = sbr.rel (%p439) target = $region44
      $region43: #{tpu_custom_call.1} parent=5 // pred_region
        %s442 = ssub.s32 %s22, 2
        // Predicated region
        $region45: #{tpu_custom_call.1} parent=43 // pred_check
          %p443 = pneg %p126
        $region46: #{tpu_custom_call.1} parent=43 // pred_check_branch
          %445 = sbr.rel (%p443) target = $region48
        $region47: #{tpu_custom_call.1} parent=43 // pred_region
          %s446 = sand.u32 %s111, 1
          %s447 = scalar_lea.sflag [#allocation6], %s446
          %s448 = sand.u32 %s111, 1
          %s449 = smul.addr %s448, 16
          %s450 = scalar_lea.vmem [#allocation7], %s449
          %451 = dma.done %s447, 256
        $region48: #{tpu_custom_call.1} parent=43 // pred_fallthru
          _
      $region44: #{tpu_custom_call.1} parent=5 // pred_fallthru
        _
    $region6: #{tpu_custom_call.1} parent=1 // loop_footer
      %s26 = sadd.s32 1, %s22
    $region7: #{tpu_custom_call.1} parent=1 // loop_footer_branch
      %21 = sbr.rel target = $region3
    $region8: #{tpu_custom_call.1} parent=1 // loop_exit
      _
    %452 = vsyncpa [#allocation5], 1
    %s453 = scalar_lea.sflag [#allocation5], 1
    %454 = vsyncpa %s453, 1
    %455 = vsyncpa [#allocation6], 1
    %s456 = scalar_lea.sflag [#allocation6], 1
    %457 = vsyncpa %s456, 1

// kernel: tpu_custom_call.1
$region0: #{tpu_custom_call.1}
  #allocation0 [shape = 'u32[]', space=smem, size = 0x4, offset = 0x4, fixed_abs, tag = 'smem constant byte address 0x4 - core index']
  #allocation1 [shape = 'u32[144,128]{1,0:T(1,128)}', space=vmem, size = 0x12000, scoped, tag = 'internal scratch']
  #allocation2 [shape = 's32[1]{0}', space=sflag, size = 0x4, scoped, tag = 'scoped memory for tpu_custom_call.1']
  #allocation3 [shape = 'u8[512]{0}', space=smem, size = 0x200, scoped, tag = 'prefetched SMEM operand 0']
  %s0 = inlined_call_operand.vmem [shape: s32[4], index: 0, kind: input, shape index: {}]
  %s1 = inlined_call_operand.vmem [shape: bf16[64,32], index: 1, kind: input, shape index: {}]
  %s2 = inlined_call_operand.vmem [shape: bf16[32,128], index: 2, kind: input, shape index: {}]
  %s3 = inlined_call_operand.hbm [shape: bf16[4,32,32], index: 3, kind: input, shape index: {}]
  %s4 = inlined_call_operand.hbm [shape: f32[64,128], index: 4, kind: output, shape index: {}]
  %s5 = sld [smem:[#allocation0]]
  $region49: #{tpu_custom_call.1} parent=0
    _
  %s7 = ssub.s32 1, %s5
  %s8 = scalar_select 0, %s7, %s5
  %s9 = sshll.u32 %s0, 4
  %s10 = int_to_ptr.vmem [resolvable:$true] %s9
  %12 = dma.vmem_to_smem %s10, 16, [#allocation3], [#allocation2]
  %13 = dma.done [#allocation2], 16
  %14 = sfence
  $region1: #{tpu_custom_call.1} parent=0
    #allocation4 [shape = 'u8[16384]{0}', space=vmem, size = 0x4000, scoped, tag = 'input window, operand 3']
    #allocation5 [shape = 's32[2]{0}', space=sflag, size = 0x8, scoped, tag = 'scoped memory for tpu_custom_call.1']
    #allocation6 [shape = 's32[2]{0}', space=sflag, size = 0x8, scoped, tag = 'scoped memory for tpu_custom_call.1']
    #allocation7 [shape = 'u8[16384]{0}', space=vmem, size = 0x4000, scoped, tag = 'output window, operand 0']
    %15 = vsyncpa [#allocation5], 0
    %s16 = scalar_lea.sflag [#allocation5], 1
    %17 = vsyncpa %s16, 0
    %18 = vsyncpa [#allocation6], 0
    %s19 = scalar_lea.sflag [#allocation6], 1
    %20 = vsyncpa %s19, 0
    loop: start=0, step=1, limit=6
    $region2: #{tpu_custom_call.1} parent=1 // loop_pre_header
      _
    $region3: #{tpu_custom_call.1} parent=1 // loop_header
      %s22 = sphi 0, %s26
      %p23 = scmp.ge.s32.totalorder %s22, 6
      %s32 = sphi 0, %s34
      %s35 = sphi 0, %s32
      %s36 = sphi 0, %s35
      %s52 = sphi 0, %s36
      %s56 = sphi 0, %s56
      %s58 = sphi 0, %s56
      %s59 = sphi 0, %s58
      %s73 = sphi 0, %s59
      %s81 = sphi 0, %s83
      %s84 = sphi 0, %s81
      %s85 = sphi 0, %s84
      %s101 = sphi 0, %s85
      %s107 = sphi 0, %s109
      %s110 = sphi 0, %s107
      %s111 = sphi 0, %s110
      %s127 = sphi 0, %s111
    $region4: #{tpu_custom_call.1} parent=1 // loop_header_branch
      %25 = sbr.rel (%p23) target = $region8
    $region5: #{tpu_custom_call.1} parent=1 // loop_body
      %s27 = ssub.s32 %s22, 1
      %s28 = ssub.s32 %s22, 2
      %s29 = sadd.s32 %s22, 1
      %s30 = ssub.s32 %s22, %s29
      %p31 = scmp.eq.s32.totalorder %s30, 0
      %s33 = sadd.s32 %s32, 1
      %s34 = scalar_select %p31, %s32, %s33
      %p37 = pneg %p31
      %p38 = scmp.eq.s32.totalorder %s22, 3
      %p39 = por %p37, %p38
      %p40 = scmp.ne.s32.totalorder %s32, %s35
      %p41 = scmp.eq.s32.totalorder %s22, 0
      %p42 = por %p40, %p41
      %p43 = scmp.ne.s32.totalorder %s32, %s35
      %p44 = scmp.eq.s32.totalorder %s27, 3
      %p45 = por %p43, %p44
      %p46 = scmp.ne.s32.totalorder %s35, %s36
      %p47 = scmp.eq.s32.totalorder %s27, 0
      %p48 = por %p46, %p47
      %p49 = scmp.ne.s32.totalorder %s35, %s36
      %p50 = scmp.eq.s32.totalorder %s28, 3
      %p51 = por %p49, %p50
      %p53 = scmp.ne.s32.totalorder %s36, %s52
      %p54 = scmp.eq.s32.totalorder %s28, 0
      %p55 = por %p53, %p54
      %s57 = sadd.s32 %s56, 1
      %p60 = scmp.eq.s32.totalorder %s22, 3
      %p61 = scmp.ne.s32.totalorder %s56, %s58
      %p62 = scmp.eq.s32.totalorder %s22, 0
      %p63 = por %p61, %p62
      %p64 = scmp.ne.s32.totalorder %s56, %s58
      %p65 = scmp.eq.s32.totalorder %s27, 3
      %p66 = por %p64, %p65
      %p67 = scmp.ne.s32.totalorder %s58, %s59
      %p68 = scmp.eq.s32.totalorder %s27, 0
      %p69 = por %p67, %p68
      %p70 = scmp.ne.s32.totalorder %s58, %s59
      %p71 = scmp.eq.s32.totalorder %s28, 3
      %p72 = por %p70, %p71
      %p74 = scmp.ne.s32.totalorder %s59, %s73
      %p75 = scmp.eq.s32.totalorder %s28, 0
      %p76 = por %p74, %p75
      %s77 = sld [smem:[#allocation3 + %s22]]
      %s78 = sld [smem:[#allocation3 + %s29]]
      %s79 = ssub.s32 %s77, %s78
      %p80 = scmp.eq.s32.totalorder %s79, 0
      %s82 = sadd.s32 %s81, 1
      %s83 = scalar_select %p80, %s81, %s82
      %p86 = pneg %p80
      %p87 = scmp.eq.s32.totalorder %s22, 3
      %p88 = por %p86, %p87
      %p89 = scmp.ne.s32.totalorder %s81, %s84
      %p90 = scmp.eq.s32.totalorder %s22, 0
      %p91 = por %p89, %p90
      %p92 = scmp.ne.s32.totalorder %s81, %s84
      %p93 = scmp.eq.s32.totalorder %s27, 3
      %p94 = por %p92, %p93
      %p95 = scmp.ne.s32.totalorder %s84, %s85
      %p96 = scmp.eq.s32.totalorder %s27, 0
      %p97 = por %p95, %p96
      %p98 = scmp.ne.s32.totalorder %s84, %s85
      %p99 = scmp.eq.s32.totalorder %s28, 3
      %p100 = por %p98, %p99
      %p102 = scmp.ne.s32.totalorder %s85, %s101
      %p103 = scmp.eq.s32.totalorder %s28, 0
      %p104 = por %p102, %p103
      %s105 = ssub.s32 %s22, %s29
      %p106 = scmp.eq.s32.totalorder %s105, 0
      %s108 = sadd.s32 %s107, 1
      %s109 = scalar_select %p106, %s107, %s108
      %p112 = pneg %p106
      %p113 = scmp.eq.s32.totalorder %s22, 3
      %p114 = por %p112, %p113
      %p115 = scmp.ne.s32.totalorder %s107, %s110
      %p116 = scmp.eq.s32.totalorder %s22, 0
      %p117 = por %p115, %p116
      %p118 = scmp.ne.s32.totalorder %s107, %s110
      %p119 = scmp.eq.s32.totalorder %s27, 3
      %p120 = por %p118, %p119
      %p121 = scmp.ne.s32.totalorder %s110, %s111
      %p122 = scmp.eq.s32.totalorder %s27, 0
      %p123 = por %p121, %p122
      %p124 = scmp.ne.s32.totalorder %s110, %s111
      %p125 = scmp.eq.s32.totalorder %s28, 3
      %p126 = por %p124, %p125
      %p128 = scmp.ne.s32.totalorder %s111, %s127
      %p129 = scmp.eq.s32.totalorder %s28, 0
      %p130 = por %p128, %p129
      %p131 = scmp.le.s32.totalorder 1, %s22
      %p132 = scmp.lt.s32.totalorder %s22, 5
      %p133 = pnand %p131, %p132
      %p134 = pneg %p133
      // Predicated region
      $region9: #{tpu_custom_call.1} parent=5 // pred_check
        _
      $region10: #{tpu_custom_call.1} parent=5 // pred_check_branch
        %136 = sbr.rel (%p133) target = $region12
      $region11: #{tpu_custom_call.1} parent=5 // pred_region
        %s137 = ssub.s32 %s22, 1
        // Predicated region
        $region13: #{tpu_custom_call.1} parent=11 // pred_check
          %p138 = pneg %p69
        $region14: #{tpu_custom_call.1} parent=11 // pred_check_branch
          %140 = sbr.rel (%p138) target = $region16
        $region15: #{tpu_custom_call.1} parent=11 // pred_region
          _
        $region16: #{tpu_custom_call.1} parent=11 // pred_fallthru
          _
      $region12: #{tpu_custom_call.1} parent=5 // pred_fallthru
        _
      %p141 = scmp.lt.s32.totalorder %s22, 4
      // Predicated region
      $region17: #{tpu_custom_call.1} parent=5 // pred_check
        %p142 = pneg %p141
      $region18: #{tpu_custom_call.1} parent=5 // pred_check_branch
        %144 = sbr.rel (%p142) target = $region20
      $region19: #{tpu_custom_call.1} parent=5 // pred_region
        // Predicated region
        $region21: #{tpu_custom_call.1} parent=19 // pred_check
          %p145 = pneg %p42
        $region22: #{tpu_custom_call.1} parent=19 // pred_check_branch
          %147 = sbr.rel (%p145) target = $region24
        $region23: #{tpu_custom_call.1} parent=19 // pred_region
          %s148 = smul.u32 2, %s22
          %p149 = scmp.lt.s32.totalorder %s148, 7
          %s150 = scalar_select %p149, %s148, 7
          %s151 = smul.addr %s150, 4
          %s152 = scalar_lea.vmem %s1, %s151
          %s153 = smul.u32 2, %s22
        $region24: #{tpu_custom_call.1} parent=19 // pred_fallthru
          _
        // Predicated region
        $region25: #{tpu_custom_call.1} parent=19 // pred_check
          %p154 = pneg %p91
        $region26: #{tpu_custom_call.1} parent=19 // pred_check_branch
          %156 = sbr.rel (%p154) target = $region28
        $region27: #{tpu_custom_call.1} parent=19 // pred_region
          %s157 = sand.u32 %s81, 1
          %s158 = scalar_lea.sflag [#allocation5], %s157
          %s159 = sand.u32 %s81, 1
          %s160 = smul.addr %s159, 16
          %s161 = scalar_lea.vmem [#allocation4], %s160
          %s162 = sld [smem:[#allocation3 + %s22]]
          %s164 = ssub.s32 256, 256
          %165 = vsyncadd %s158, %s164
          %s166 = smul.addr %s162, 4
          %s167 = smul.addr %s166, 64
          %s168 = scalar_lea.hbm %s3, %s167
          %s169 = sshll.u32 %s161, 4
          %s170 = int_to_ptr.vmem [resolvable:$true] %s169
          %175 = dma.hbm_to_vmem [thread:$0]  %s168, 256, %s170, %s158, 64, 64, 4
        $region28: #{tpu_custom_call.1} parent=19 // pred_fallthru
          _
      $region20: #{tpu_custom_call.1} parent=5 // pred_fallthru
        _
      %p176 = scmp.le.s32.totalorder 1, %s22
      %p177 = scmp.lt.s32.totalorder %s22, 5
      %p178 = pnand %p176, %p177
      %p179 = pneg %p178
      // Predicated region
      $region29: #{tpu_custom_call.1} parent=5 // pred_check
        _
      $region30: #{tpu_custom_call.1} parent=5 // pred_check_branch
        %181 = sbr.rel (%p178) target = $region32
      $region31: #{tpu_custom_call.1} parent=5 // pred_region
        %s182 = ssub.s32 %s22, 1
        %s183 = sand.u32 %s84, 1
        %s184 = scalar_lea.sflag [#allocation5], %s183
        %s185 = sand.u32 %s84, 1
        %s186 = smul.addr %s185, 16
        %s187 = scalar_lea.vmem [#allocation4], %s186
        // Predicated region
        $region33: #{tpu_custom_call.1} parent=31 // pred_check
          %p188 = pneg %p97
        $region34: #{tpu_custom_call.1} parent=31 // pred_check_branch
          %190 = sbr.rel (%p188) target = $region36
        $region35: #{tpu_custom_call.1} parent=31 // pred_region
          %191 = dma.done %s184, 256
        $region36: #{tpu_custom_call.1} parent=31 // pred_fallthru
          _
        %s192 = smul.u32 2, %s27
        %p193 = scmp.lt.s32.totalorder %s192, 7
        %s194 = scalar_select %p193, %s192, 7
        %s195 = smul.addr %s194, 4
        %s196 = scalar_lea.vmem %s1, %s195
        %p197 = pneg %p48
        %p198 = pneg %p45
        %p199 = pneg %p69
        %p200 = pneg %p66
        %s201 = sand.u32 %s84, 1
        %s202 = scalar_lea.sflag [#allocation5], %s201
        %s203 = sand.u32 %s84, 1
        %s204 = smul.addr %s203, 16
        %s205 = scalar_lea.vmem [#allocation4], %s204
        %p206 = pneg %p97
        %p207 = pneg %p94
        %p208 = pneg %p123
        %p209 = pneg %p120
        %s210 = sand.u32 %s110, 1
        %s211 = scalar_lea.sflag [#allocation6], %s210
        %s212 = sand.u32 %s110, 1
        %s213 = smul.addr %s212, 16
        %s214 = scalar_lea.vmem [#allocation7], %s213
        %s215 = smul.u32 2, %s27
        %p216 = scmp.lt.s32.totalorder %s215, 7
        %s217 = scalar_select %p216, %s215, 7
        %s218 = smul.addr %s217, 4
        %s219 = scalar_lea.vmem %s1, %s218
        %s220 = smul.u32 2, %s27
        %s221 = sld [smem:[#allocation3 + %s27]]
        %s222 = smul.u32 2, %s27
        %v224 = vld [vmem:[%s219] sm:$0xf]
        %v225 = vld [vmem:[%s219 + $0x4] sm:$0xf]
        %v226 = vld [vmem:[%s2] sm:$0xf]
        %v227 = vld [vmem:[%s2 + $0x4] sm:$0xf]
        %v228 = vld [vmem:[%s2 + $0x8] sm:$0xf]
        %v229 = vld [vmem:[%s2 + $0xc] sm:$0xf]
        %v230 = vld [vmem:[%s187] sm:$0xf]
        %v231 = vld [vmem:[%s187 + $0x4] sm:$0xf]
        %v232 = vld [vmem:[%s187 + $0x8] sm:$0xf]
        %v233 = vld [vmem:[%s187 + $0xc] sm:$0xf]
        %v236 = vunpack.c.l.b16 %v224
        %v237 = vunpack.c.l.b16 %v225
        %v238 = vpack.c.b16 %v237, %v236
        %v243 = vunpack.c.l.b16 %v226
        %v244 = vunpack.c.l.b16 %v227
        %v245 = vunpack.c.l.b16 %v228
        %v246 = vunpack.c.l.b16 %v229
        %v247 = vpack.c.b16 %v244, %v243
        %v248 = vpack.c.b16 %v246, %v245
        %vm251 = vcmask 261120
        %v253 = vsel %vm251, %v238, 0
        %255 = vmatprep.subr.bf16.mxu0 0
        %256 = vmatpush1.bf16.msra.mxu0 %v247
        %257 = vmatprep.subr.bf16.mxu0 0
        %258 = vmatpush1.bf16.msra.mxu0 %v248
        %259 = vmatprep.subr.bf16.mxu0 0
        %260 = vmatpush1.bf16.msra.mxu0 0
        %261 = vmatprep.subr.bf16.mxu0 0
        %262 = vmatpush1.bf16.msra.mxu0 0
        %263 = vmatprep.subr.bf16.mxu0 0
        %264 = vmatpush1.bf16.msra.mxu0 0
        %265 = vmatprep.subr.bf16.mxu0 0
        %266 = vmatpush1.bf16.msra.mxu0 0
        %267 = vmatprep.subr.bf16.mxu0 0
        %268 = vmatpush1.bf16.msra.mxu0 0
        %269 = vmatprep.subr.bf16.mxu0 0
        %270 = vmatpush1.bf16.msra.mxu0 0
        %271 = vmatprep.subr.bf16.mxu0 0
        %272 = vmatpush1.bf16.msra.mxu0 0
        %273 = vmatprep.subr.bf16.mxu0 0
        %274 = vmatpush1.bf16.msra.mxu0 0
        %275 = vmatprep.subr.bf16.mxu0 0
        %276 = vmatpush1.bf16.msra.mxu0 0
        %277 = vmatprep.subr.bf16.mxu0 0
        %278 = vmatpush1.bf16.msra.mxu0 0
        %279 = vmatprep.subr.bf16.mxu0 0
        %280 = vmatpush1.bf16.msra.mxu0 0
        %281 = vmatprep.subr.bf16.mxu0 0
        %282 = vmatpush1.bf16.msra.mxu0 0
        %283 = vmatprep.subr.bf16.mxu0 0
        %284 = vmatpush1.bf16.msra.mxu0 0
        %285 = vmatprep.subr.bf16.mxu0 0
        %286 = vmatpush1.bf16.msra.mxu0 0
        %287 = vmatprep.mubr.bf16.mxu0 0
        %288 = vmatmul.mubr.bf16.gmra.mrb[0].mxu0 %v253
        %v289 = vpop.f32.mrb[0].mxu0
        %v290 = vadd.f32 0.0, %v289
        %v291 = vpop.f32.mrb[0].mxu0
        %v292 = vpop.f32.mrb[0].mxu0
        %v293 = vadd.f32 0.0, %v292
        %v294 = vpop.f32.mrb[0].mxu0
        %295 = vdwg.mxu0
        %296 = vmax.xlane.f32.xlu0 %v290
        %v297 = vpop.xlane.xlu0 %296
        %298 = vmax.xlane.f32.xlu0 %v293
        %v299 = vpop.xlane.xlu0 %298
        %v300 = vsub.f32 %v290, %v297
        %v301 = vsub.f32 %v293, %v299
        %v302 = vmul.f32 %v300, 1.442695
        %v303 = vpow.pop %v302
        %v304 = vmul.f32 %v301, 1.442695
        %v305 = vpow.pop %v304
        %306 = vadd.xlane.f32.xlu0 %v303
        %v307 = vpop.xlane.xlu0 %306
        %308 = vadd.xlane.f32.xlu0 %v305
        %v309 = vpop.xlane.xlu0 %308
        %v314 = vunpack.c.l.b16 %v230
        %v315 = vunpack.c.l.b16 %v231
        %v316 = vunpack.c.l.b16 %v232
        %v317 = vunpack.c.l.b16 %v233
        %v318 = vpack.c.b16 %v315, %v314
        %v319 = vpack.c.b16 %v317, %v316
        %322 = vmatprep.subr.bf16.mxu0 0
        %323 = vmatpush1.bf16.msra.mxu0 %v318
        %324 = vmatprep.subr.bf16.mxu0 0
        %325 = vmatpush1.bf16.msra.mxu0 %v319
        %326 = vmatprep.subr.bf16.mxu0 0
        %327 = vmatpush1.bf16.msra.mxu0 0
        %328 = vmatprep.subr.bf16.mxu0 0
        %329 = vmatpush1.bf16.msra.mxu0 0
        %330 = vmatprep.subr.bf16.mxu0 0
        %331 = vmatpush1.bf16.msra.mxu0 0
        %332 = vmatprep.subr.bf16.mxu0 0
        %333 = vmatpush1.bf16.msra.mxu0 0
        %334 = vmatprep.subr.bf16.mxu0 0
        %335 = vmatpush1.bf16.msra.mxu0 0
        %336 = vmatprep.subr.bf16.mxu0 0
        %337 = vmatpush1.bf16.msra.mxu0 0
        %338 = vmatprep.subr.bf16.mxu0 0
        %339 = vmatpush1.bf16.msra.mxu0 0
        %340 = vmatprep.subr.bf16.mxu0 0
        %341 = vmatpush1.bf16.msra.mxu0 0
        %342 = vmatprep.subr.bf16.mxu0 0
        %343 = vmatpush1.bf16.msra.mxu0 0
        %344 = vmatprep.subr.bf16.mxu0 0
        %345 = vmatpush1.bf16.msra.mxu0 0
        %346 = vmatprep.subr.bf16.mxu0 0
        %347 = vmatpush1.bf16.msra.mxu0 0
        %348 = vmatprep.subr.bf16.mxu0 0
        %349 = vmatpush1.bf16.msra.mxu0 0
        %350 = vmatprep.subr.bf16.mxu0 0
        %351 = vmatpush1.bf16.msra.mxu0 0
        %352 = vmatprep.subr.bf16.mxu0 0
        %353 = vmatpush1.bf16.msra.mxu0 0
        %354 = vmatprep.mubr.bf16.mxu0 0
        %355 = vmatmul.mubr.bf16.gmra.mrb[0].mxu0 %v253
        %v356 = vpop.f32.mrb[0].mxu0
        %v357 = vadd.f32 0.0, %v356
        %v358 = vpop.f32.mrb[0].mxu0
        %v359 = vpop.f32.mrb[0].mxu0
        %v360 = vadd.f32 0.0, %v359
        %v361 = vpop.f32.mrb[0].mxu0
        %362 = vdwg.mxu0
        %v363 = vsub.f32 %v357, %v297
        %v364 = vsub.f32 %v360, %v299
        %v365 = vmul.f32 %v363, 1.442695
        %v366 = vpow.pop %v365
        %v367 = vmul.f32 %v364, 1.442695
        %v368 = vpow.pop %v367
        %v369 = vsel %vm251, %v366, 0.0
        %370 = vadd.xlane.f32.xlu0 %v369
        %v371 = vpop.xlane.xlu0 %370
        %v372 = vsel %vm251, %v368, 0.0
        %373 = vadd.xlane.f32.xlu0 %v372
        %v374 = vpop.xlane.xlu0 %373
        %v375 = vsel %vm251, %v363, 0.0
        %376 = vadd.xlane.f32.xlu0 %v375
        %v377 = vpop.xlane.xlu0 %376
        %v378 = vsel %vm251, %v364, 0.0
        %379 = vadd.xlane.f32.xlu0 %v378
        %v380 = vpop.xlane.xlu0 %379
        %v381 = vsub.f32 %v307, %v371
        %v382 = vsub.f32 %v309, %v374
        %v383 = vadd.f32 %v381, 32.0
        %v384 = vadd.f32 %v382, 32.0
        %v385 = vadd.f32 %v366, %v383
        %v386 = vadd.f32 %v368, %v384
        %v387 = vadd.f32 %v385, 1e-10
        %v388 = vadd.f32 %v386, 1e-10
        %v389 = vlog2.pop %v387
        %v390 = vmul.f32 %v389, 0.6931472
        %v391 = vlog2.pop %v388
        %v392 = vmul.f32 %v391, 0.6931472
        %v393 = vsel %vm251, %v390, 0.0
        %394 = vadd.xlane.f32.xlu0 %v393
        %v395 = vpop.xlane.xlu0 %394
        %v396 = vsel %vm251, %v392, 0.0
        %397 = vadd.xlane.f32.xlu0 %v396
        %v398 = vpop.xlane.xlu0 %397
        %v399 = vsub.f32 %v377, %v395
        %v400 = vsub.f32 %v380, %v398
        %v401 = vadd.f32 %v383, 1.0
        %v402 = vadd.f32 %v384, 1.0
        %v403 = vadd.f32 %v401, 1e-10
        %v404 = vadd.f32 %v402, 1e-10
        %v405 = vlog2.pop %v403
        %v406 = vmul.f32 %v405, 0.6931472
        %v407 = vlog2.pop %v404
        %v408 = vmul.f32 %v407, 0.6931472
        %v409 = vmul.f32 %v406, 96.0
        %v410 = vmul.f32 %v408, 96.0
        %v411 = vsub.f32 %v399, %v409
        %v412 = vsub.f32 %v400, %v410
        %v413 = vmul.f32 %v411, 0.03125
        %v414 = vmul.f32 %v412, 0.03125
        %415 = vst [vmem:[%s214] sm:$0xff] %v413
        %416 = vst [vmem:[%s214 + $0x8] sm:$0xff] %v414
        %s417 = sand.u32 %s110, 1
        %s418 = scalar_lea.sflag [#allocation6], %s417
        %s419 = sand.u32 %s110, 1
        %s420 = smul.addr %s419, 16
        %s421 = scalar_lea.vmem [#allocation7], %s420
        // Predicated region
        $region37: #{tpu_custom_call.1} parent=31 // pred_check
          %p422 = pneg %p120
        $region38: #{tpu_custom_call.1} parent=31 // pred_check_branch
          %424 = sbr.rel (%p422) target = $region40
        $region39: #{tpu_custom_call.1} parent=31 // pred_region
          %s425 = smul.u32 2, %s27
          %s427 = ssub.s32 256, 256
          %428 = vsyncadd %s418, %s427
          %s429 = smul.addr %s425, 128
          %s430 = scalar_lea.hbm %s4, %s429
          %s431 = sshll.u32 %s421, 4
          %s432 = int_to_ptr.vmem [resolvable:$true] %s431
          %437 = dma.vmem_to_hbm [thread:$0]  %s432, 256, %s430, %s418, 128, 128, 8
        $region40: #{tpu_custom_call.1} parent=31 // pred_fallthru
          _
      $region32: #{tpu_custom_call.1} parent=5 // pred_fallthru
        _
      %p438 = scmp.le.s32.totalorder 2, %s22
      // Predicated region
      $region41: #{tpu_custom_call.1} parent=5 // pred_check
        %p439 = pneg %p438
      $region42: #{tpu_custom_call.1} parent=5 // pred_check_branch
        %441 = sbr.rel (%p439) target = $region44
      $region43: #{tpu_custom_call.1} parent=5 // pred_region
        %s442 = ssub.s32 %s22, 2
        // Predicated region
        $region45: #{tpu_custom_call.1} parent=43 // pred_check
          %p443 = pneg %p126
        $region46: #{tpu_custom_call.1} parent=43 // pred_check_branch
          %445 = sbr.rel (%p443) target = $region48
        $region47: #{tpu_custom_call.1} parent=43 // pred_region
          %s446 = sand.u32 %s111, 1
          %s447 = scalar_lea.sflag [#allocation6], %s446
          %s448 = sand.u32 %s111, 1
          %s449 = smul.addr %s448, 16
          %s450 = scalar_lea.vmem [#allocation7], %s449
          %451 = dma.done %s447, 256
        $region48: #{tpu_custom_call.1} parent=43 // pred_fallthru
          _
      $region44: #{tpu_custom_call.1} parent=5 // pred_fallthru
        _
    $region6: #{tpu_custom_call.1} parent=1 // loop_footer
      %s26 = sadd.s32 1, %s22
    $region7: #{tpu_custom_call.1} parent=1 // loop_footer_branch
      %21 = sbr.rel target = $region3
    $region8: #{tpu_custom_call.1} parent=1 // loop_exit
      _
    %452 = vsyncpa [#allocation5], 1
    %s453 = scalar_lea.sflag [#allocation5], 1
    %454 = vsyncpa %s453, 1
    %455 = vsyncpa [#allocation6], 1
    %s456 = scalar_lea.sflag [#allocation6], 1
    %457 = vsyncpa %s456, 1

</llo_original>
